<compile_context>
chip_gen: v7x
topology: tpu7x:2x2x1
jax: 0.10.0
libtpu: 0.0.40
codegen_flags: <defaults>
</compile_context>

<pallas_src>
import math

import jax
import jax.numpy as jnp
from jax.experimental import pallas as pl
from jax.experimental.pallas import tpu as pltpu


def _sublane_quantum(dtype):
    """Rows per packed sublane/HBM-tile group: 8 (f32), 16 (bf16), 32 (i8/fp8)."""
    itemsize = jnp.dtype(dtype).itemsize
    return max(8, 32 // max(1, itemsize))


def _pick_lane_dim(total):
    """Lane-dense divisor of `total` (multiple of 128) for a tile-aligned 2-D slab."""
    for lanes in (2048, 1024, 512, 4096, 8192, 256, 128):
        if total % lanes == 0:
            return lanes
    return None  # unaligned size: single whole-array DMA fallback


def _make_chunks(rows, quantum, target_chunks=8):
    """Static (start, size) chunks along the leading dim; starts quantum-aligned."""
    if rows <= quantum or target_chunks <= 1:
        return [(0, rows)]
    n = min(target_chunks, max(1, rows // quantum))
    base = max(quantum, ((rows // n) // quantum) * quantum)
    chunks = []
    start = 0
    while start < rows:
        size = min(base, rows - start)
        chunks.append((start, size))
        start += size
    return chunks


def _make_dma_copy_kernel(chunks):
    """HBM->HBM copy: issue every chunk DMA (concurrent), then wait on all."""

    def kernel(x_ref, o_ref, sems):
        for c, (start, size) in enumerate(chunks):
            pltpu.make_async_copy(
                x_ref.at[pl.ds(start, size)],
                o_ref.at[pl.ds(start, size)],
                sems.at[c],
            ).start()
        for c, (start, size) in enumerate(chunks):
            pltpu.make_async_copy(
                x_ref.at[pl.ds(start, size)],
                o_ref.at[pl.ds(start, size)],
                sems.at[c],
            ).wait()

    return kernel


def _resolve_shape(x, shape):
    """torch.Tensor.view-style shape resolution (single -1 allowed)."""
    n_in = int(math.prod(x.shape[1:])) if x.ndim > 1 else 1
    shape = tuple(int(d) for d in shape)
    if shape.count(-1) > 1:
        raise ValueError("Reshape: at most one -1 dimension is allowed")
    if -1 in shape:
        known = int(math.prod(d for d in shape if d != -1))
        if known == 0 or n_in % known != 0:
            raise ValueError(f"Reshape: cannot infer -1 for {x.shape} -> {shape}")
        shape = tuple((n_in // known) if d == -1 else d for d in shape)
    if int(math.prod(shape)) != n_in:
        raise ValueError(f"Reshape: element count mismatch {x.shape} -> {shape}")
    return shape


def reshape_forward(x, shape, *, materialize=True, target_chunks=8):
    """Pallas-backed equivalent of `x.view(x.size(0), *shape)`.

    materialize=False returns the free metadata-only view (zero HBM traffic,
    the review's preferred path).  materialize=True (default) produces a fresh
    buffer via a direct HBM->HBM DMA copy kernel.
    """
    B = x.shape[0]
    shape = _resolve_shape(x, shape)
    out_shape = (B,) + shape

    if not materialize:
        return x.reshape(out_shape)  # optimal: no data movement at all

    total = int(math.prod(out_shape))
    itemsize = jnp.dtype(x.dtype).itemsize
    lanes = _pick_lane_dim(total)
    if lanes is None:
        # Unaligned total: one whole-array DMA — always correct, VMEM-independent.
        flat_shape = (1, total)
        chunks = [(0, 1)]
    else:
        rows = total // lanes
        flat_shape = (rows, lanes)
        chunks = _make_chunks(rows, _sublane_quantum(x.dtype), target_chunks)

    # Row-major reshape preserves flat element order -> free metadata views.
    x_flat = x.reshape(flat_shape)

    y_flat = pl.pallas_call(
        _make_dma_copy_kernel(chunks),
        out_shape=jax.ShapeDtypeStruct(flat_shape, x.dtype),
        in_specs=[pl.BlockSpec(memory_space=pl.ANY)],
        out_specs=pl.BlockSpec(memory_space=pl.ANY),
        scratch_shapes=[pltpu.SemaphoreType.DMA((len(chunks),))],
        cost_estimate=pl.CostEstimate(
            flops=0, transcendentals=0, bytes_accessed=2 * total * itemsize
        ),
    )(x_flat)

    return y_flat.reshape(out_shape)  # free metadata-only view


class Reshape:
    """Mirror of the PyTorch darknet Reshape module."""

    def __init__(self, *args):
        self.shape = args

    def __call__(self, x):
        return reshape_forward(x, self.shape)


if __name__ == "__main__":
    key = jax.random.PRNGKey(0)
    # Small NCHW input consistent with darknet usage: B=2, C=4, H=W=16.
    x = jax.random.normal(key, (2, 4, 16, 16), dtype=jnp.float32)

    # Reshape each batch element's 4*16*16 = 1024 values to (16, 8, 8).
    module = Reshape(16, 8, 8)
    out = jax.block_until_ready(module(x))
    ref = x.reshape(x.shape[0], 16, 8, 8)  # the module's view() semantics
    assert out.shape == ref.shape == (2, 16, 8, 8), out.shape
    assert out.dtype == x.dtype
    assert bool(jnp.array_equal(out, ref)), "Pallas reshape mismatch vs reference"

    # -1 handling like torch.view.
    out_flat = jax.block_until_ready(Reshape(-1)(x))
    assert out_flat.shape == (2, 1024), out_flat.shape
    assert bool(jnp.array_equal(out_flat, x.reshape(2, -1)))

    # Unaligned total (2*3*5*7 = 210 elements): exercises the whole-array DMA fallback.
    x_odd = jax.random.normal(jax.random.PRNGKey(1), (2, 3, 5, 7), dtype=jnp.float32)
    out_odd = jax.block_until_ready(Reshape(-1)(x_odd))
    assert out_odd.shape == (2, 105), out_odd.shape
    assert bool(jnp.array_equal(out_odd, x_odd.reshape(2, -1)))

    # Metadata-only path (zero-copy view) also matches.
    out_view = jax.block_until_ready(
        reshape_forward(x, (16, 8, 8), materialize=False))
    assert bool(jnp.array_equal(out_view, ref))

    print("KERNEL_OK")
</pallas_src>

<mosaic_0001>
module attributes {stable_mosaic.version = 11 : i64} {
  func.func @kernel(%arg0: memref<1x2048xf32, #tpu.memory_space<any>>, %arg1: memref<1x2048xf32, #tpu.memory_space<any>>, %arg2: memref<1x!tpu.dma_semaphore, #tpu.memory_space<semaphore_mem>>) attributes {dimension_semantics = [], scalar_prefetch = 0 : i64, scratch_operands = 1 : i64, tpu.core_type = #tpu.core_type<tc>} {
    %c0_i32 = arith.constant 0 : i32
    %c0_i32_0 = arith.constant 0 : i32
    %c0_i32_1 = arith.constant 0 : i32
    %0 = tpu.memref_slice %arg0[%c0_i32_0, %c0_i32_1] : memref<1x2048xf32, #tpu.memory_space<any>> -> memref<1x2048xf32, #tpu.memory_space<any>>
    %c0_i32_2 = arith.constant 0 : i32
    %c0_i32_3 = arith.constant 0 : i32
    %1 = tpu.memref_slice %arg1[%c0_i32_2, %c0_i32_3] : memref<1x2048xf32, #tpu.memory_space<any>> -> memref<1x2048xf32, #tpu.memory_space<any>>
    %2 = tpu.memref_slice %arg2[%c0_i32] : memref<1x!tpu.dma_semaphore, #tpu.memory_space<semaphore_mem>> -> memref<1x!tpu.dma_semaphore, #tpu.memory_space<semaphore_mem>>
    %3 = tpu.memref_squeeze %2 : memref<1x!tpu.dma_semaphore, #tpu.memory_space<semaphore_mem>> -> memref<!tpu.dma_semaphore, #tpu.memory_space<semaphore_mem>>
    tpu.enqueue_dma source(%0 : memref<1x2048xf32, #tpu.memory_space<any>>) target(%1 : memref<1x2048xf32, #tpu.memory_space<any>>) target_semaphore(%3 : memref<!tpu.dma_semaphore, #tpu.memory_space<semaphore_mem>>)
    %c0_i32_4 = arith.constant 0 : i32
    %c0_i32_5 = arith.constant 0 : i32
    %c0_i32_6 = arith.constant 0 : i32
    %4 = tpu.memref_slice %arg0[%c0_i32_5, %c0_i32_6] : memref<1x2048xf32, #tpu.memory_space<any>> -> memref<1x2048xf32, #tpu.memory_space<any>>
    %c0_i32_7 = arith.constant 0 : i32
    %c0_i32_8 = arith.constant 0 : i32
    %5 = tpu.memref_slice %arg1[%c0_i32_7, %c0_i32_8] : memref<1x2048xf32, #tpu.memory_space<any>> -> memref<1x2048xf32, #tpu.memory_space<any>>
    %6 = tpu.memref_slice %arg2[%c0_i32_4] : memref<1x!tpu.dma_semaphore, #tpu.memory_space<semaphore_mem>> -> memref<1x!tpu.dma_semaphore, #tpu.memory_space<semaphore_mem>>
    %7 = tpu.memref_squeeze %6 : memref<1x!tpu.dma_semaphore, #tpu.memory_space<semaphore_mem>> -> memref<!tpu.dma_semaphore, #tpu.memory_space<semaphore_mem>>
    tpu.wait_dma2 semaphore(%7 : memref<!tpu.dma_semaphore, #tpu.memory_space<semaphore_mem>>) src(%4 : memref<1x2048xf32, #tpu.memory_space<any>>) dst(%5 : memref<1x2048xf32, #tpu.memory_space<any>>)
    return
  }
}

</mosaic_0001>

<llo_original>
// kernel: tpu_custom_call.1
$region0: #{tpu_custom_call.1}
  #allocation0 [shape = 'u32[]', space=smem, size = 0x4, offset = 0x4, fixed_abs, tag = 'smem constant byte address 0x4 - core index']
  #allocation1 [shape = 'u32[144,128]{1,0:T(1,128)}', space=vmem, size = 0x12000, scoped, tag = 'internal scratch']
  #allocation2 [shape = 's32[1]{0}', space=sflag, size = 0x4, scoped, tag = 'scratch operand']
  #allocation3 [shape = 's32[]', space=sflag, size = 0x4, offset = 0, fixed_abs, tag = 'sflag constant byte address 0x0 - dummy sync flag']
  #allocation4 [shape = 'u32[0]{0}', space=smem, size = 0, offset = 0, fixed_abs, tag = 'smem constant byte address 0x0 - null']
  %s0 = inlined_call_operand.hbm [shape: f32[1,2048], index: 0, kind: input, shape index: {}]
  %s1 = inlined_call_operand.hbm [shape: f32[1,2048], index: 1, kind: output, shape index: {}]
  %s2 = sld [smem:[#allocation0]]
  $region2: #{tpu_custom_call.1} parent=0
    _
  %s4 = ssub.s32 1, %s2
  %s5 = scalar_select 0, %s4, %s2
  %s7 = sshll.u32 1, 14
  %s8 = sxor.u32 4294967295, %s7
  %s11 = sshll.u32 3, 24
  %s12 = sxor.u32 4294967295, %s11
  %s13 = sand.u32 0, %s12
  %s15 = sor.u32 %s13, 0
  %18 = dma.general %s0, 256, %s1, [#allocation2], [#allocation3], [#allocation4], %s15, 0
  %s19 = smul.u32 1, 16
  %s20 = sshll.u32 %s19, 4
  %21 = dma.done [#allocation2], %s20
  %22 = vsyncmov [#allocation2]
  %s23 = vpop.sfrf %22
  %p24 = scmp.eq.s32.totalorder %s23, 0
  %p25 = pneg %p24
  %27 = shalt.err (%p25)

</llo_original>
